<compile_context>
chip_gen: v7x
topology: tpu7x:2x2x1
jax: 0.10.0
libtpu: 0.0.40
codegen_flags: <defaults>
</compile_context>

<pallas_src>
import jax
import jax.numpy as jnp
from jax.experimental import pallas as pl
from jax.experimental.pallas import tpu as pltpu

LANE = 128


def _round_up(n, m):
    return (n + m - 1) // m * m


def _leaky_relu(h, slope=0.01):
    return jnp.where(h > 0, h, slope * h)


def mlp_kernel(x_ref, w1_ref, b1_ref, w2_ref, b2_ref, w3_ref, b3_ref,
               w4_ref, b4_ref, o_ref):
    """Whole MLP fused: 3 MXU matmuls + VPU elementwise + 1 matvec epilogue."""
    x = x_ref[...]                       # [bt, Dp]  (compute dtype)
    cdt = x.dtype

    h = jnp.dot(x, w1_ref[...], preferred_element_type=jnp.float32) + b1_ref[...]
    h = _leaky_relu(h).astype(cdt)       # Dropout(0.1): identity in eval mode

    h = jnp.dot(h, w2_ref[...], preferred_element_type=jnp.float32) + b2_ref[...]
    h = _leaky_relu(h).astype(cdt)

    h = jnp.dot(h, w3_ref[...], preferred_element_type=jnp.float32) + b3_ref[...]
    h = _leaky_relu(h).astype(cdt)       # [bt, 128] (hidden 64 zero-padded)

    # Final Linear(64 -> 1) as w4[1,128] . h[bt,128]^T -> [1, bt]: batch lands
    # on the lane axis, so the store is lane-dense (unmasked vst) instead of a
    # masked single-lane store per 8 rows.
    out = jnp.einsum("od,bd->ob", w4_ref[...], h,
                     preferred_element_type=jnp.float32)
    o_ref[...] = (out + b4_ref[...]).astype(o_ref.dtype)


def prepare_params(params, compute_dtype):
    """Pad/cast params for the kernel.

    Weights are stored as [in, out] (nn.Linear's [out, in] transposed once at
    construction time).  input_dim and the 64-wide hidden layer are zero-padded
    to multiples of 128 so loads and MXU K/N dims are lane-aligned (zero pads
    are mathematically inert).  Biases stay f32 and are added after the f32
    accumulated matmul.
    """
    (w1, b1), (w2, b2), (w3, b3), (w4, b4) = params
    d_in = w1.shape[0]
    d_pad = _round_up(d_in, LANE)
    h3 = w3.shape[1]
    h3_pad = _round_up(h3, LANE)

    w1p = jnp.zeros((d_pad, w1.shape[1]), compute_dtype).at[:d_in, :].set(
        w1.astype(compute_dtype))
    w2p = w2.astype(compute_dtype)
    w3p = jnp.zeros((w3.shape[0], h3_pad), compute_dtype).at[:, :h3].set(
        w3.astype(compute_dtype))
    w4p = jnp.zeros((1, h3_pad), compute_dtype).at[:, :h3].set(
        w4.reshape(1, -1).astype(compute_dtype))

    b1p = b1.reshape(1, -1).astype(jnp.float32)
    b2p = b2.reshape(1, -1).astype(jnp.float32)
    b3p = jnp.zeros((1, h3_pad), jnp.float32).at[:, :h3].set(
        b3.astype(jnp.float32))
    b4p = b4.reshape(1, 1).astype(jnp.float32)
    return (w1p, b1p, w2p, b2p, w3p, b3p, w4p, b4p), d_pad


def pauli_nn_forward(x, params, *, batch_tile=256, compute_dtype=jnp.bfloat16):
    """x: [B, input_dim] float32 -> [B, 1] float32.

    batch_tile: rows per grid step (rounded to a multiple of 128; sweep
    256/512/1024).  compute_dtype=bf16 uses the bf16-native MXU on v6e/v7x
    with f32 accumulation; pass jnp.float32 for strict-parity mode.
    """
    B, D = x.shape
    (w1p, b1p, w2p, b2p, w3p, b3p, w4p, b4p), d_pad = prepare_params(
        params, compute_dtype)

    bt = min(_round_up(int(batch_tile), LANE), _round_up(B, LANE))
    b_pad = _round_up(B, bt)

    xp = jnp.zeros((b_pad, d_pad), compute_dtype).at[:B, :D].set(
        x.astype(compute_dtype))

    grid = (b_pad // bt,)
    const = lambda i: (0, 0)             # weights/biases: same block every step

    out_row = pl.pallas_call(
        mlp_kernel,
        out_shape=jax.ShapeDtypeStruct((1, b_pad), jnp.float32),
        grid_spec=pltpu.PrefetchScalarGridSpec(
            num_scalar_prefetch=0,
            grid=grid,
            in_specs=[
                pl.BlockSpec((bt, d_pad), lambda i: (i, 0)),    # x tile
                pl.BlockSpec(w1p.shape, const),
                pl.BlockSpec(b1p.shape, const),
                pl.BlockSpec(w2p.shape, const),
                pl.BlockSpec(b2p.shape, const),
                pl.BlockSpec(w3p.shape, const),
                pl.BlockSpec(b3p.shape, const),
                pl.BlockSpec(w4p.shape, const),
                pl.BlockSpec(b4p.shape, const),
            ],
            out_specs=pl.BlockSpec((1, bt), lambda i: (0, i)),  # lane-dense
        ),
        compiler_params=pltpu.CompilerParams(
            dimension_semantics=("parallel",)),
    )(xp, w1p, b1p, w2p, b2p, w3p, b3p, w4p, b4p)

    # (1, b_pad) row-major == (b_pad, 1) row-major; slice off batch padding.
    return out_row.reshape(b_pad, 1)[:B]


def init_params(key, input_dim):
    """Deterministic init matching nn.Linear shapes (W stored as [in, out])."""
    dims = [(input_dim, 256), (256, 128), (128, 64), (64, 1)]
    params = []
    for (fan_in, fan_out) in dims:
        key, kw, kb = jax.random.split(key, 3)
        bound = 1.0 / jnp.sqrt(fan_in)
        w = jax.random.uniform(kw, (fan_in, fan_out), jnp.float32, -bound, bound)
        b = jax.random.uniform(kb, (fan_out,), jnp.float32, -bound, bound)
        params.append((w, b))
    return params


def reference_forward(x, params):
    h = x
    for i, (w, b) in enumerate(params):
        h = h @ w + b
        if i < len(params) - 1:
            h = jnp.where(h > 0, h, 0.01 * h)
    return h


if __name__ == "__main__":
    key = jax.random.PRNGKey(0)
    k_x1, k_x2, k_p = jax.random.split(key, 3)

    input_dim = 32
    params = init_params(k_p, input_dim)

    # 1) strict f32 parity at a small batch (exercises padding 8 -> 128 rows).
    x_small = jax.random.normal(k_x1, (8, input_dim), jnp.float32)
    out_f32 = jax.block_until_ready(
        pauli_nn_forward(x_small, params, compute_dtype=jnp.float32))
    ref_small = reference_forward(x_small, params)
    assert out_f32.shape == (8, 1)
    assert jnp.allclose(out_f32, ref_small, atol=1e-4, rtol=1e-4)

    # 2) bf16 fast path with a multi-step grid (B=300 -> padded 384, 3 tiles).
    x_big = jax.random.normal(k_x2, (300, input_dim), jnp.float32)
    out_bf16 = jax.block_until_ready(
        pauli_nn_forward(x_big, params, batch_tile=128,
                         compute_dtype=jnp.bfloat16))
    ref_big = reference_forward(x_big, params)
    assert out_bf16.shape == (300, 1)
    assert jnp.allclose(out_bf16, ref_big, atol=5e-2, rtol=5e-2)

    print("KERNEL_OK")
</pallas_src>

<mosaic_0001>
module attributes {stable_mosaic.version = 11 : i64} {
  func.func @mlp_kernel(%arg0: i32, %arg1: memref<128x128xf32, #tpu.memory_space<vmem>>, %arg2: memref<128x256xf32, #tpu.memory_space<vmem>>, %arg3: memref<1x256xf32, #tpu.memory_space<vmem>>, %arg4: memref<256x128xf32, #tpu.memory_space<vmem>>, %arg5: memref<1x128xf32, #tpu.memory_space<vmem>>, %arg6: memref<128x128xf32, #tpu.memory_space<vmem>>, %arg7: memref<1x128xf32, #tpu.memory_space<vmem>>, %arg8: memref<1x128xf32, #tpu.memory_space<vmem>>, %arg9: memref<1x1xf32, #tpu.memory_space<vmem>>, %arg10: memref<1x128xf32, #tpu.memory_space<vmem>>) attributes {dimension_semantics = [#tpu.dimension_semantics<parallel>], iteration_bounds = array<i64: 1>, scalar_prefetch = 0 : i64, scratch_operands = 0 : i64, tpu.core_type = #tpu.core_type<tc>, window_params = [{transform_indices = @transform_0, window_bounds = array<i64: 128, 128>}, {pipeline_mode = #tpu.pipeline_mode<synchronous>, transform_indices = @transform_1, window_bounds = array<i64: 128, 256>}, {pipeline_mode = #tpu.pipeline_mode<synchronous>, transform_indices = @transform_2, window_bounds = array<i64: 1, 256>}, {pipeline_mode = #tpu.pipeline_mode<synchronous>, transform_indices = @transform_3, window_bounds = array<i64: 256, 128>}, {pipeline_mode = #tpu.pipeline_mode<synchronous>, transform_indices = @transform_4, window_bounds = array<i64: 1, 128>}, {pipeline_mode = #tpu.pipeline_mode<synchronous>, transform_indices = @transform_5, window_bounds = array<i64: 128, 128>}, {pipeline_mode = #tpu.pipeline_mode<synchronous>, transform_indices = @transform_6, window_bounds = array<i64: 1, 128>}, {pipeline_mode = #tpu.pipeline_mode<synchronous>, transform_indices = @transform_7, window_bounds = array<i64: 1, 128>}, {pipeline_mode = #tpu.pipeline_mode<synchronous>, transform_indices = @transform_8, window_bounds = array<i64: 1, 1>}, {transform_indices = @transform_9, window_bounds = array<i64: 1, 128>}]} {
    %c0 = arith.constant 0 : index
    %c0_0 = arith.constant 0 : index
    %0 = vector.load %arg1[%c0, %c0_0] : memref<128x128xf32, #tpu.memory_space<vmem>>, vector<128x128xf32>
    %c0_1 = arith.constant 0 : index
    %c0_2 = arith.constant 0 : index
    %1 = vector.load %arg2[%c0_1, %c0_2] : memref<128x256xf32, #tpu.memory_space<vmem>>, vector<128x256xf32>
    %cst = arith.constant dense<0.000000e+00> : vector<128x256xf32>
    %2 = tpu.matmul %0, %1, %cst {dimension_numbers = #tpu.dot_dimension_numbers<[1], [0], [0], [1], [0, 0, 1, 1], [], []>} : vector<128x128xf32>, vector<128x256xf32>, vector<128x256xf32> -> vector<128x256xf32>
    %c0_3 = arith.constant 0 : index
    %c0_4 = arith.constant 0 : index
    %3 = vector.load %arg3[%c0_3, %c0_4] : memref<1x256xf32, #tpu.memory_space<vmem>>, vector<1x256xf32>
    %4 = vector.broadcast %3 : vector<1x256xf32> to vector<128x256xf32>
    %5 = arith.addf %2, %4 : vector<128x256xf32>
    %cst_5 = arith.constant 0.000000e+00 : f32
    %6 = vector.broadcast %cst_5 : f32 to vector<128x256xf32>
    %7 = arith.cmpf ogt, %5, %6 : vector<128x256xf32>
    %cst_6 = arith.constant 0.00999999977 : f32
    %8 = vector.broadcast %cst_6 : f32 to vector<128x256xf32>
    %9 = arith.mulf %8, %5 : vector<128x256xf32>
    %10 = arith.select %7, %5, %9 : vector<128x256xi1>, vector<128x256xf32>
    %c0_7 = arith.constant 0 : index
    %c0_8 = arith.constant 0 : index
    %11 = vector.load %arg4[%c0_7, %c0_8] : memref<256x128xf32, #tpu.memory_space<vmem>>, vector<256x128xf32>
    %cst_9 = arith.constant dense<0.000000e+00> : vector<128x128xf32>
    %12 = tpu.matmul %10, %11, %cst_9 {dimension_numbers = #tpu.dot_dimension_numbers<[1], [0], [0], [1], [0, 0, 1, 1], [], []>} : vector<128x256xf32>, vector<256x128xf32>, vector<128x128xf32> -> vector<128x128xf32>
    %c0_10 = arith.constant 0 : index
    %c0_11 = arith.constant 0 : index
    %13 = vector.load %arg5[%c0_10, %c0_11] : memref<1x128xf32, #tpu.memory_space<vmem>>, vector<1x128xf32>
    %14 = vector.broadcast %13 : vector<1x128xf32> to vector<128x128xf32>
    %15 = arith.addf %12, %14 : vector<128x128xf32>
    %cst_12 = arith.constant 0.000000e+00 : f32
    %16 = vector.broadcast %cst_12 : f32 to vector<128x128xf32>
    %17 = arith.cmpf ogt, %15, %16 : vector<128x128xf32>
    %cst_13 = arith.constant 0.00999999977 : f32
    %18 = vector.broadcast %cst_13 : f32 to vector<128x128xf32>
    %19 = arith.mulf %18, %15 : vector<128x128xf32>
    %20 = arith.select %17, %15, %19 : vector<128x128xi1>, vector<128x128xf32>
    %c0_14 = arith.constant 0 : index
    %c0_15 = arith.constant 0 : index
    %21 = vector.load %arg6[%c0_14, %c0_15] : memref<128x128xf32, #tpu.memory_space<vmem>>, vector<128x128xf32>
    %cst_16 = arith.constant dense<0.000000e+00> : vector<128x128xf32>
    %22 = tpu.matmul %20, %21, %cst_16 {dimension_numbers = #tpu.dot_dimension_numbers<[1], [0], [0], [1], [0, 0, 1, 1], [], []>} : vector<128x128xf32>, vector<128x128xf32>, vector<128x128xf32> -> vector<128x128xf32>
    %c0_17 = arith.constant 0 : index
    %c0_18 = arith.constant 0 : index
    %23 = vector.load %arg7[%c0_17, %c0_18] : memref<1x128xf32, #tpu.memory_space<vmem>>, vector<1x128xf32>
    %24 = vector.broadcast %23 : vector<1x128xf32> to vector<128x128xf32>
    %25 = arith.addf %22, %24 : vector<128x128xf32>
    %cst_19 = arith.constant 0.000000e+00 : f32
    %26 = vector.broadcast %cst_19 : f32 to vector<128x128xf32>
    %27 = arith.cmpf ogt, %25, %26 : vector<128x128xf32>
    %cst_20 = arith.constant 0.00999999977 : f32
    %28 = vector.broadcast %cst_20 : f32 to vector<128x128xf32>
    %29 = arith.mulf %28, %25 : vector<128x128xf32>
    %30 = arith.select %27, %25, %29 : vector<128x128xi1>, vector<128x128xf32>
    %c0_21 = arith.constant 0 : index
    %c0_22 = arith.constant 0 : index
    %31 = vector.load %arg8[%c0_21, %c0_22] : memref<1x128xf32, #tpu.memory_space<vmem>>, vector<1x128xf32>
    "tpu.trace_start"() <{level = 10 : i32, message = "od,bd->ob"}> : () -> ()
    %cst_23 = arith.constant dense<0.000000e+00> : vector<1x128xf32>
    %32 = tpu.matmul %31, %30, %cst_23 {dimension_numbers = #tpu.dot_dimension_numbers<[1], [1], [0], [0], [0, 0, 1, 0], [], []>} : vector<1x128xf32>, vector<128x128xf32>, vector<1x128xf32> -> vector<1x128xf32>
    "tpu.trace_stop"() : () -> ()
    %c0_24 = arith.constant 0 : index
    %c0_25 = arith.constant 0 : index
    %33 = vector.load %arg9[%c0_24, %c0_25] : memref<1x1xf32, #tpu.memory_space<vmem>>, vector<1x1xf32>
    %34 = vector.broadcast %33 : vector<1x1xf32> to vector<1x128xf32>
    %35 = arith.addf %32, %34 : vector<1x128xf32>
    %c0_26 = arith.constant 0 : index
    %c0_27 = arith.constant 0 : index
    %36 = vector.load %arg10[%c0_26, %c0_27] : memref<1x128xf32, #tpu.memory_space<vmem>>, vector<1x128xf32>
    tpu.vector_store %arg10[%c0_26, %c0_27], %35 {strides = array<i32>} : memref<1x128xf32, #tpu.memory_space<vmem>>, vector<1x128xf32>,
    return
  }
  func.func @transform_0(%arg0: i32) -> (i32, i32) {
    %c0_i32 = arith.constant 0 : i32
    %c0_i32_0 = arith.constant 0 : i32
    return %arg0, %c0_i32 : i32, i32
  }
  func.func @transform_1(%arg0: i32) -> (i32, i32) {
    %c0_i32 = arith.constant 0 : i32
    %c0_i32_0 = arith.constant 0 : i32
    %c0_i32_1 = arith.constant 0 : i32
    return %c0_i32, %c0_i32_0 : i32, i32
  }
  func.func @transform_2(%arg0: i32) -> (i32, i32) {
    %c0_i32 = arith.constant 0 : i32
    %c0_i32_0 = arith.constant 0 : i32
    %c0_i32_1 = arith.constant 0 : i32
    return %c0_i32, %c0_i32_0 : i32, i32
  }
  func.func @transform_3(%arg0: i32) -> (i32, i32) {
    %c0_i32 = arith.constant 0 : i32
    %c0_i32_0 = arith.constant 0 : i32
    %c0_i32_1 = arith.constant 0 : i32
    return %c0_i32, %c0_i32_0 : i32, i32
  }
  func.func @transform_4(%arg0: i32) -> (i32, i32) {
    %c0_i32 = arith.constant 0 : i32
    %c0_i32_0 = arith.constant 0 : i32
    %c0_i32_1 = arith.constant 0 : i32
    return %c0_i32, %c0_i32_0 : i32, i32
  }
  func.func @transform_5(%arg0: i32) -> (i32, i32) {
    %c0_i32 = arith.constant 0 : i32
    %c0_i32_0 = arith.constant 0 : i32
    %c0_i32_1 = arith.constant 0 : i32
    return %c0_i32, %c0_i32_0 : i32, i32
  }
  func.func @transform_6(%arg0: i32) -> (i32, i32) {
    %c0_i32 = arith.constant 0 : i32
    %c0_i32_0 = arith.constant 0 : i32
    %c0_i32_1 = arith.constant 0 : i32
    return %c0_i32, %c0_i32_0 : i32, i32
  }
  func.func @transform_7(%arg0: i32) -> (i32, i32) {
    %c0_i32 = arith.constant 0 : i32
    %c0_i32_0 = arith.constant 0 : i32
    %c0_i32_1 = arith.constant 0 : i32
    return %c0_i32, %c0_i32_0 : i32, i32
  }
  func.func @transform_8(%arg0: i32) -> (i32, i32) {
    %c0_i32 = arith.constant 0 : i32
    %c0_i32_0 = arith.constant 0 : i32
    %c0_i32_1 = arith.constant 0 : i32
    return %c0_i32, %c0_i32_0 : i32, i32
  }
  func.func @transform_9(%arg0: i32) -> (i32, i32) {
    %c0_i32 = arith.constant 0 : i32
    %c0_i32_0 = arith.constant 0 : i32
    return %c0_i32, %arg0 : i32, i32
  }
}

</mosaic_0001>

<llo_original>
// kernel: tpu_custom_call.1
$region0: #{tpu_custom_call.1}
  #allocation0 [shape = 'u32[]', space=smem, size = 0x4, offset = 0x4, fixed_abs, tag = 'smem constant byte address 0x4 - core index']
  #allocation1 [shape = 'u32[144,128]{1,0:T(1,128)}', space=vmem, size = 0x12000, scoped, tag = 'internal scratch']
  #allocation2 [shape = 'f32[1,1]{1,0:T(1,128)S(1)}', space=vmem, size = 0x200, scoped, tag = 'scoped memory for tpu_custom_call.1']
  %s0 = inlined_call_operand.hbm [shape: f32[128,128], index: 0, kind: input, shape index: {}]
  %s1 = inlined_call_operand.hbm [shape: f32[128,256], index: 1, kind: input, shape index: {}]
  %s2 = inlined_call_operand.vmem [shape: f32[1,256], index: 2, kind: input, shape index: {}]
  %s3 = inlined_call_operand.hbm [shape: f32[256,128], index: 3, kind: input, shape index: {}]
  %s4 = inlined_call_operand.vmem [shape: f32[1,128], index: 4, kind: input, shape index: {}]
  %s5 = inlined_call_operand.hbm [shape: f32[128,128], index: 5, kind: input, shape index: {}]
  %s6 = inlined_call_operand.vmem [shape: f32[1,128], index: 6, kind: input, shape index: {}]
  %s7 = inlined_call_operand.vmem [shape: f32[1,128], index: 7, kind: input, shape index: {}]
  %s8 = inlined_call_operand.<no memory space> [shape: f32[1,1], index: 8, kind: input, shape index: {}]
  %s9 = inlined_call_operand.hbm [shape: f32[1,128], index: 9, kind: output, shape index: {}]
  %s10 = sld [smem:[#allocation0]]
  $region62: #{tpu_custom_call.1} parent=0
    _
  %s12 = ssub.s32 1, %s10
  %s13 = scalar_select 0, %s12, %s10
  %v14 = vstv %s8
  %15 = vst [vmem:[#allocation2] sm:$0x1] %v14
  $region1: #{tpu_custom_call.1} parent=0
    #allocation3 [shape = 'u8[65536]{0}', space=vmem, size = 0x10000, scoped, tag = 'input window, operand 0, single buffered']
    #allocation4 [shape = 's32[1]{0}', space=sflag, size = 0x4, scoped, tag = 'scoped memory for tpu_custom_call.1']
    #allocation5 [shape = 's32[1]{0}', space=sflag, size = 0x4, scoped, tag = 'scoped memory for tpu_custom_call.1']
    #allocation6 [shape = 'u8[131072]{0}', space=vmem, size = 0x20000, scoped, tag = 'input window, operand 1, single buffered']
    #allocation7 [shape = 's32[1]{0}', space=sflag, size = 0x4, scoped, tag = 'scoped memory for tpu_custom_call.1']
    #allocation8 [shape = 'u8[131072]{0}', space=vmem, size = 0x20000, scoped, tag = 'input window, operand 3, single buffered']
    #allocation9 [shape = 'u8[65536]{0}', space=vmem, size = 0x10000, scoped, tag = 'input window, operand 5, single buffered']
    #allocation10 [shape = 's32[1]{0}', space=sflag, size = 0x4, scoped, tag = 'scoped memory for tpu_custom_call.1']
    #allocation11 [shape = 'u8[512]{0}', space=vmem, size = 0x400, scoped, tag = 'output window, operand 0, single buffered']
    %16 = vsyncpa [#allocation4], 0
    %17 = vsyncpa [#allocation7], 0
    %18 = vsyncpa [#allocation10], 0
    %19 = vsyncpa [#allocation5], 0
    // Predicated region
    $region2: #{tpu_custom_call.1} parent=1 // pred_check
      _
    $region3: #{tpu_custom_call.1} parent=1 // pred_check_branch
      %21 = sbr.rel (0) target = $region5
    $region4: #{tpu_custom_call.1} parent=1 // pred_region
      %s23 = ssub.s32 2048, 2048
      %24 = vsyncadd [#allocation4], %s23
      %s25 = sshll.u32 [#allocation3], 4
      %s26 = int_to_ptr.vmem [resolvable:$true] %s25
      %31 = dma.hbm_to_vmem [thread:$0]  %s0, 2048, %s26, [#allocation4], 128, 128, 8
    $region5: #{tpu_custom_call.1} parent=1 // pred_fallthru
      _
    // Predicated region
    $region6: #{tpu_custom_call.1} parent=1 // pred_check
      _
    $region7: #{tpu_custom_call.1} parent=1 // pred_check_branch
      %33 = sbr.rel (0) target = $region9
    $region8: #{tpu_custom_call.1} parent=1 // pred_region
      %s35 = ssub.s32 4096, 4096
      %36 = vsyncadd [#allocation7], %s35
      %s37 = sshll.u32 [#allocation6], 4
      %s38 = int_to_ptr.vmem [resolvable:$true] %s37
      %43 = dma.hbm_to_vmem [thread:$0]  %s1, 4096, %s38, [#allocation7], 256, 256, 16
    $region9: #{tpu_custom_call.1} parent=1 // pred_fallthru
      _
    // Predicated region
    $region10: #{tpu_custom_call.1} parent=1 // pred_check
      _
    $region11: #{tpu_custom_call.1} parent=1 // pred_check_branch
      %45 = sbr.rel (0) target = $region13
    $region12: #{tpu_custom_call.1} parent=1 // pred_region
      _
    $region13: #{tpu_custom_call.1} parent=1 // pred_fallthru
      _
    // Predicated region
    $region14: #{tpu_custom_call.1} parent=1 // pred_check
      _
    $region15: #{tpu_custom_call.1} parent=1 // pred_check_branch
      %47 = sbr.rel (0) target = $region17
    $region16: #{tpu_custom_call.1} parent=1 // pred_region
      %s49 = ssub.s32 4096, 4096
      %50 = vsyncadd [#allocation7], %s49
      %s51 = sshll.u32 [#allocation8], 4
      %s52 = int_to_ptr.vmem [resolvable:$true] %s51
      %57 = dma.hbm_to_vmem [thread:$0]  %s3, 4096, %s52, [#allocation7], 128, 128, 8
    $region17: #{tpu_custom_call.1} parent=1 // pred_fallthru
      _
    // Predicated region
    $region18: #{tpu_custom_call.1} parent=1 // pred_check
      _
    $region19: #{tpu_custom_call.1} parent=1 // pred_check_branch
      %59 = sbr.rel (0) target = $region21
    $region20: #{tpu_custom_call.1} parent=1 // pred_region
      _
    $region21: #{tpu_custom_call.1} parent=1 // pred_fallthru
      _
    // Predicated region
    $region22: #{tpu_custom_call.1} parent=1 // pred_check
      _
    $region23: #{tpu_custom_call.1} parent=1 // pred_check_branch
      %61 = sbr.rel (0) target = $region25
    $region24: #{tpu_custom_call.1} parent=1 // pred_region
      %s63 = ssub.s32 2048, 2048
      %64 = vsyncadd [#allocation10], %s63
      %s65 = sshll.u32 [#allocation9], 4
      %s66 = int_to_ptr.vmem [resolvable:$true] %s65
      %71 = dma.hbm_to_vmem [thread:$0]  %s5, 2048, %s66, [#allocation10], 128, 128, 8
    $region25: #{tpu_custom_call.1} parent=1 // pred_fallthru
      _
    // Predicated region
    $region26: #{tpu_custom_call.1} parent=1 // pred_check
      _
    $region27: #{tpu_custom_call.1} parent=1 // pred_check_branch
      %73 = sbr.rel (0) target = $region29
    $region28: #{tpu_custom_call.1} parent=1 // pred_region
      _
    $region29: #{tpu_custom_call.1} parent=1 // pred_fallthru
      _
    // Predicated region
    $region30: #{tpu_custom_call.1} parent=1 // pred_check
      _
    $region31: #{tpu_custom_call.1} parent=1 // pred_check_branch
      %75 = sbr.rel (0) target = $region33
    $region32: #{tpu_custom_call.1} parent=1 // pred_region
      _
    $region33: #{tpu_custom_call.1} parent=1 // pred_fallthru
      _
    // Predicated region
    $region34: #{tpu_custom_call.1} parent=1 // pred_check
      _
    $region35: #{tpu_custom_call.1} parent=1 // pred_check_branch
      %77 = sbr.rel (0) target = $region37
    $region36: #{tpu_custom_call.1} parent=1 // pred_region
      _
    $region37: #{tpu_custom_call.1} parent=1 // pred_fallthru
      _
    // Predicated region
    $region38: #{tpu_custom_call.1} parent=1 // pred_check
      _
    $region39: #{tpu_custom_call.1} parent=1 // pred_check_branch
      %79 = sbr.rel (0) target = $region41
    $region40: #{tpu_custom_call.1} parent=1 // pred_region
      %80 = dma.done [#allocation4], 2048
    $region41: #{tpu_custom_call.1} parent=1 // pred_fallthru
      _
    // Predicated region
    $region42: #{tpu_custom_call.1} parent=1 // pred_check
      _
    $region43: #{tpu_custom_call.1} parent=1 // pred_check_branch
      %82 = sbr.rel (0) target = $region45
    $region44: #{tpu_custom_call.1} parent=1 // pred_region
      %83 = dma.done [#allocation7], 4096
    $region45: #{tpu_custom_call.1} parent=1 // pred_fallthru
      _
    // Predicated region
    $region46: #{tpu_custom_call.1} parent=1 // pred_check
      _
    $region47: #{tpu_custom_call.1} parent=1 // pred_check_branch
      %85 = sbr.rel (0) target = $region49
    $region48: #{tpu_custom_call.1} parent=1 // pred_region
      %86 = dma.done [#allocation7], 4096
    $region49: #{tpu_custom_call.1} parent=1 // pred_fallthru
      _
    // Predicated region
    $region50: #{tpu_custom_call.1} parent=1 // pred_check
      _
    $region51: #{tpu_custom_call.1} parent=1 // pred_check_branch
      %88 = sbr.rel (0) target = $region53
    $region52: #{tpu_custom_call.1} parent=1 // pred_region
      %89 = dma.done [#allocation10], 2048
    $region53: #{tpu_custom_call.1} parent=1 // pred_fallthru
      _
    %v90 = vld [vmem:[#allocation3] sm:$0xff]
    %v91 = vld [vmem:[#allocation3 + $0x8] sm:$0xff]
    %v92 = vld [vmem:[#allocation3 + $0x10] sm:$0xff]
    %v93 = vld [vmem:[#allocation3 + $0x18] sm:$0xff]
    %v94 = vld [vmem:[#allocation3 + $0x20] sm:$0xff]
    %v95 = vld [vmem:[#allocation3 + $0x28] sm:$0xff]
    %v96 = vld [vmem:[#allocation3 + $0x30] sm:$0xff]
    %v97 = vld [vmem:[#allocation3 + $0x38] sm:$0xff]
    %v98 = vld [vmem:[#allocation3 + $0x40] sm:$0xff]
    %v99 = vld [vmem:[#allocation3 + $0x48] sm:$0xff]
    %v100 = vld [vmem:[#allocation3 + $0x50] sm:$0xff]
    %v101 = vld [vmem:[#allocation3 + $0x58] sm:$0xff]
    %v102 = vld [vmem:[#allocation3 + $0x60] sm:$0xff]
    %v103 = vld [vmem:[#allocation3 + $0x68] sm:$0xff]
    %v104 = vld [vmem:[#allocation3 + $0x70] sm:$0xff]
    %v105 = vld [vmem:[#allocation3 + $0x78] sm:$0xff]
    %v106 = vld [vmem:[#allocation6] sm:$0xff]
    %v107 = vld [vmem:[#allocation6 + $0x8] sm:$0xff]
    %v108 = vld [vmem:[#allocation6 + $0x10] sm:$0xff]
    %v109 = vld [vmem:[#allocation6 + $0x18] sm:$0xff]
    %v110 = vld [vmem:[#allocation6 + $0x20] sm:$0xff]
    %v111 = vld [vmem:[#allocation6 + $0x28] sm:$0xff]
    %v112 = vld [vmem:[#allocation6 + $0x30] sm:$0xff]
    %v113 = vld [vmem:[#allocation6 + $0x38] sm:$0xff]
    %v114 = vld [vmem:[#allocation6 + $0x40] sm:$0xff]
    %v115 = vld [vmem:[#allocation6 + $0x48] sm:$0xff]
    %v116 = vld [vmem:[#allocation6 + $0x50] sm:$0xff]
    %v117 = vld [vmem:[#allocation6 + $0x58] sm:$0xff]
    %v118 = vld [vmem:[#allocation6 + $0x60] sm:$0xff]
    %v119 = vld [vmem:[#allocation6 + $0x68] sm:$0xff]
    %v120 = vld [vmem:[#allocation6 + $0x70] sm:$0xff]
    %v121 = vld [vmem:[#allocation6 + $0x78] sm:$0xff]
    %v122 = vld [vmem:[#allocation6 + $0x80] sm:$0xff]
    %v123 = vld [vmem:[#allocation6 + $0x88] sm:$0xff]
    %v124 = vld [vmem:[#allocation6 + $0x90] sm:$0xff]
    %v125 = vld [vmem:[#allocation6 + $0x98] sm:$0xff]
    %v126 = vld [vmem:[#allocation6 + $0xa0] sm:$0xff]
    %v127 = vld [vmem:[#allocation6 + $0xa8] sm:$0xff]
    %v128 = vld [vmem:[#allocation6 + $0xb0] sm:$0xff]
    %v129 = vld [vmem:[#allocation6 + $0xb8] sm:$0xff]
    %v130 = vld [vmem:[#allocation6 + $0xc0] sm:$0xff]
    %v131 = vld [vmem:[#allocation6 + $0xc8] sm:$0xff]
    %v132 = vld [vmem:[#allocation6 + $0xd0] sm:$0xff]
    %v133 = vld [vmem:[#allocation6 + $0xd8] sm:$0xff]
    %v134 = vld [vmem:[#allocation6 + $0xe0] sm:$0xff]
    %v135 = vld [vmem:[#allocation6 + $0xe8] sm:$0xff]
    %v136 = vld [vmem:[#allocation6 + $0xf0] sm:$0xff]
    %v137 = vld [vmem:[#allocation6 + $0xf8] sm:$0xff]
    %v138 = vld [vmem:[%s2] sm:$0x3]
    %v140 = vlaneseq
    %v141 = vshrl.u32 %v140, 7
    %v142 = vsub.s32 0, %v141
    %v143 = vrot.slane %v138, %v142
    %v144 = vlaneseq
    %v145 = vshrl.u32 %v144, 7
    %v146 = vsub.s32 1, %v145
    %v147 = vrot.slane %v138, %v146
    %150 = vmatprep.subr.mxu0 %v107
    %151 = vmatpush1.msra.mxu0 %v106
    %152 = vmatprep.subr.mxu0 %v109
    %153 = vmatpush1.msra.mxu0 %v108
    %154 = vmatprep.subr.mxu0 %v111
    %155 = vmatpush1.msra.mxu0 %v110
    %156 = vmatprep.subr.mxu0 %v113
    %157 = vmatpush1.msra.mxu0 %v112
    %158 = vmatprep.subr.mxu0 %v115
    %159 = vmatpush1.msra.mxu0 %v114
    %160 = vmatprep.subr.mxu0 %v117
    %161 = vmatpush1.msra.mxu0 %v116
    %162 = vmatprep.subr.mxu0 %v119
    %163 = vmatpush1.msra.mxu0 %v118
    %164 = vmatprep.subr.mxu0 %v121
    %165 = vmatpush1.msra.mxu0 %v120
    %166 = vmatprep.subr.mxu0 %v123
    %167 = vmatpush1.msra.mxu0 %v122
    %168 = vmatprep.subr.mxu0 %v125
    %169 = vmatpush1.msra.mxu0 %v124
    %170 = vmatprep.subr.mxu0 %v127
    %171 = vmatpush1.msra.mxu0 %v126
    %172 = vmatprep.subr.mxu0 %v129
    %173 = vmatpush1.msra.mxu0 %v128
    %174 = vmatprep.subr.mxu0 %v131
    %175 = vmatpush1.msra.mxu0 %v130
    %176 = vmatprep.subr.mxu0 %v133
    %177 = vmatpush1.msra.mxu0 %v132
    %178 = vmatprep.subr.mxu0 %v135
    %179 = vmatpush1.msra.mxu0 %v134
    %180 = vmatprep.subr.mxu0 %v137
    %181 = vmatpush1.msra.mxu0 %v136
    %182 = vmatprep.subr.mxu0 0.0
    %183 = vmatpush1.msra.mxu0 0.0
    %184 = vmatprep.subr.mxu0 0.0
    %185 = vmatpush1.msra.mxu0 0.0
    %186 = vmatprep.subr.mxu0 0.0
    %187 = vmatpush1.msra.mxu0 0.0
    %188 = vmatprep.subr.mxu0 0.0
    %189 = vmatpush1.msra.mxu0 0.0
    %190 = vmatprep.subr.mxu0 0.0
    %191 = vmatpush1.msra.mxu0 0.0
    %192 = vmatprep.subr.mxu0 0.0
    %193 = vmatpush1.msra.mxu0 0.0
    %194 = vmatprep.subr.mxu0 0.0
    %195 = vmatpush1.msra.mxu0 0.0
    %196 = vmatprep.subr.mxu0 0.0
    %197 = vmatpush1.msra.mxu0 0.0
    %198 = vmatprep.subr.mxu0 0.0
    %199 = vmatpush1.msra.mxu0 0.0
    %200 = vmatprep.subr.mxu0 0.0
    %201 = vmatpush1.msra.mxu0 0.0
    %202 = vmatprep.subr.mxu0 0.0
    %203 = vmatpush1.msra.mxu0 0.0
    %204 = vmatprep.subr.mxu0 0.0
    %205 = vmatpush1.msra.mxu0 0.0
    %206 = vmatprep.subr.mxu0 0.0
    %207 = vmatpush1.msra.mxu0 0.0
    %208 = vmatprep.subr.mxu0 0.0
    %209 = vmatpush1.msra.mxu0 0.0
    %210 = vmatprep.subr.mxu0 0.0
    %211 = vmatpush1.msra.mxu0 0.0
    %212 = vmatprep.subr.mxu0 0.0
    %213 = vmatpush1.msra.mxu0 0.0
    %214 = vmatprep.mubr.f32.mxu0 0.0
    %215 = vmatmul.mubr.f32.gmra.mrb[0].mxu0 %v90
    %v216 = vpop.f32.mrb[0].mxu0
    %v217 = vadd.f32 %v143, %v216
    %v218 = vpop.f32.mrb[0].mxu0
    %v219 = vadd.f32 %v147, %v218
    %220 = vmatprep.mubr.f32.mxu0 0.0
    %221 = vmatmul.mubr.f32.gmra.mrb[0].mxu0 %v91
    %v222 = vpop.f32.mrb[0].mxu0
    %v223 = vadd.f32 %v143, %v222
    %v224 = vpop.f32.mrb[0].mxu0
    %v225 = vadd.f32 %v147, %v224
    %226 = vmatprep.mubr.f32.mxu0 0.0
    %227 = vmatmul.mubr.f32.gmra.mrb[0].mxu0 %v92
    %v228 = vpop.f32.mrb[0].mxu0
    %v229 = vadd.f32 %v143, %v228
    %v230 = vpop.f32.mrb[0].mxu0
    %v231 = vadd.f32 %v147, %v230
    %232 = vmatprep.mubr.f32.mxu0 0.0
    %233 = vmatmul.mubr.f32.gmra.mrb[0].mxu0 %v93
    %v234 = vpop.f32.mrb[0].mxu0
    %v235 = vadd.f32 %v143, %v234
    %v236 = vpop.f32.mrb[0].mxu0
    %v237 = vadd.f32 %v147, %v236
    %238 = vmatprep.mubr.f32.mxu0 0.0
    %239 = vmatmul.mubr.f32.gmra.mrb[0].mxu0 %v94
    %v240 = vpop.f32.mrb[0].mxu0
    %v241 = vadd.f32 %v143, %v240
    %v242 = vpop.f32.mrb[0].mxu0
    %v243 = vadd.f32 %v147, %v242
    %244 = vmatprep.mubr.f32.mxu0 0.0
    %245 = vmatmul.mubr.f32.gmra.mrb[0].mxu0 %v95
    %v246 = vpop.f32.mrb[0].mxu0
    %v247 = vadd.f32 %v143, %v246
    %v248 = vpop.f32.mrb[0].mxu0
    %v249 = vadd.f32 %v147, %v248
    %250 = vmatprep.mubr.f32.mxu0 0.0
    %251 = vmatmul.mubr.f32.gmra.mrb[0].mxu0 %v96
    %v252 = vpop.f32.mrb[0].mxu0
    %v253 = vadd.f32 %v143, %v252
    %v254 = vpop.f32.mrb[0].mxu0
    %v255 = vadd.f32 %v147, %v254
    %256 = vmatprep.mubr.f32.mxu0 0.0
    %257 = vmatmul.mubr.f32.gmra.mrb[0].mxu0 %v97
    %v258 = vpop.f32.mrb[0].mxu0
    %v259 = vadd.f32 %v143, %v258
    %v260 = vpop.f32.mrb[0].mxu0
    %v261 = vadd.f32 %v147, %v260
    %262 = vmatprep.mubr.f32.mxu0 0.0
    %263 = vmatmul.mubr.f32.gmra.mrb[0].mxu0 %v98
    %v264 = vpop.f32.mrb[0].mxu0
    %v265 = vadd.f32 %v143, %v264
    %v266 = vpop.f32.mrb[0].mxu0
    %v267 = vadd.f32 %v147, %v266
    %268 = vmatprep.mubr.f32.mxu0 0.0
    %269 = vmatmul.mubr.f32.gmra.mrb[0].mxu0 %v99
    %v270 = vpop.f32.mrb[0].mxu0
    %v271 = vadd.f32 %v143, %v270
    %v272 = vpop.f32.mrb[0].mxu0
    %v273 = vadd.f32 %v147, %v272
    %274 = vmatprep.mubr.f32.mxu0 0.0
    %275 = vmatmul.mubr.f32.gmra.mrb[0].mxu0 %v100
    %v276 = vpop.f32.mrb[0].mxu0
    %v277 = vadd.f32 %v143, %v276
    %v278 = vpop.f32.mrb[0].mxu0
    %v279 = vadd.f32 %v147, %v278
    %280 = vmatprep.mubr.f32.mxu0 0.0
    %281 = vmatmul.mubr.f32.gmra.mrb[0].mxu0 %v101
    %v282 = vpop.f32.mrb[0].mxu0
    %v283 = vadd.f32 %v143, %v282
    %v284 = vpop.f32.mrb[0].mxu0
    %v285 = vadd.f32 %v147, %v284
    %286 = vmatprep.mubr.f32.mxu0 0.0
    %287 = vmatmul.mubr.f32.gmra.mrb[0].mxu0 %v102
    %v288 = vpop.f32.mrb[0].mxu0
    %v289 = vadd.f32 %v143, %v288
    %v290 = vpop.f32.mrb[0].mxu0
    %v291 = vadd.f32 %v147, %v290
    %292 = vmatprep.mubr.f32.mxu0 0.0
    %293 = vmatmul.mubr.f32.gmra.mrb[0].mxu0 %v103
    %v294 = vpop.f32.mrb[0].mxu0
    %v295 = vadd.f32 %v143, %v294
    %v296 = vpop.f32.mrb[0].mxu0
    %v297 = vadd.f32 %v147, %v296
    %298 = vmatprep.mubr.f32.mxu0 0.0
    %299 = vmatmul.mubr.f32.gmra.mrb[0].mxu0 %v104
    %v300 = vpop.f32.mrb[0].mxu0
    %v301 = vadd.f32 %v143, %v300
    %v302 = vpop.f32.mrb[0].mxu0
    %v303 = vadd.f32 %v147, %v302
    %304 = vmatprep.mubr.f32.mxu0 0.0
    %305 = vmatmul.mubr.f32.gmra.mrb[0].mxu0 %v105
    %v306 = vpop.f32.mrb[0].mxu0
    %v307 = vadd.f32 %v143, %v306
    %v308 = vpop.f32.mrb[0].mxu0
    %v309 = vadd.f32 %v147, %v308
    %310 = vdwg.mxu0
    %vm311 = vcmp.gt.f32.partialorder %v217, 0.0
    %vm312 = vcmp.gt.f32.partialorder %v219, 0.0
    %vm313 = vcmp.gt.f32.partialorder %v223, 0.0
    %vm314 = vcmp.gt.f32.partialorder %v225, 0.0
    %vm315 = vcmp.gt.f32.partialorder %v229, 0.0
    %vm316 = vcmp.gt.f32.partialorder %v231, 0.0
    %vm317 = vcmp.gt.f32.partialorder %v235, 0.0
    %vm318 = vcmp.gt.f32.partialorder %v237, 0.0
    %vm319 = vcmp.gt.f32.partialorder %v241, 0.0
    %vm320 = vcmp.gt.f32.partialorder %v243, 0.0
    %vm321 = vcmp.gt.f32.partialorder %v247, 0.0
    %vm322 = vcmp.gt.f32.partialorder %v249, 0.0
    %vm323 = vcmp.gt.f32.partialorder %v253, 0.0
    %vm324 = vcmp.gt.f32.partialorder %v255, 0.0
    %vm325 = vcmp.gt.f32.partialorder %v259, 0.0
    %vm326 = vcmp.gt.f32.partialorder %v261, 0.0
    %vm327 = vcmp.gt.f32.partialorder %v265, 0.0
    %vm328 = vcmp.gt.f32.partialorder %v267, 0.0
    %vm329 = vcmp.gt.f32.partialorder %v271, 0.0
    %vm330 = vcmp.gt.f32.partialorder %v273, 0.0
    %vm331 = vcmp.gt.f32.partialorder %v277, 0.0
    %vm332 = vcmp.gt.f32.partialorder %v279, 0.0
    %vm333 = vcmp.gt.f32.partialorder %v283, 0.0
    %vm334 = vcmp.gt.f32.partialorder %v285, 0.0
    %vm335 = vcmp.gt.f32.partialorder %v289, 0.0
    %vm336 = vcmp.gt.f32.partialorder %v291, 0.0
    %vm337 = vcmp.gt.f32.partialorder %v295, 0.0
    %vm338 = vcmp.gt.f32.partialorder %v297, 0.0
    %vm339 = vcmp.gt.f32.partialorder %v301, 0.0
    %vm340 = vcmp.gt.f32.partialorder %v303, 0.0
    %vm341 = vcmp.gt.f32.partialorder %v307, 0.0
    %vm342 = vcmp.gt.f32.partialorder %v309, 0.0
    %v343 = vmul.f32 %v217, 0.01
    %v344 = vmul.f32 %v219, 0.01
    %v345 = vmul.f32 %v223, 0.01
    %v346 = vmul.f32 %v225, 0.01
    %v347 = vmul.f32 %v229, 0.01
    %v348 = vmul.f32 %v231, 0.01
    %v349 = vmul.f32 %v235, 0.01
    %v350 = vmul.f32 %v237, 0.01
    %v351 = vmul.f32 %v241, 0.01
    %v352 = vmul.f32 %v243, 0.01
    %v353 = vmul.f32 %v247, 0.01
    %v354 = vmul.f32 %v249, 0.01
    %v355 = vmul.f32 %v253, 0.01
    %v356 = vmul.f32 %v255, 0.01
    %v357 = vmul.f32 %v259, 0.01
    %v358 = vmul.f32 %v261, 0.01
    %v359 = vmul.f32 %v265, 0.01
    %v360 = vmul.f32 %v267, 0.01
    %v361 = vmul.f32 %v271, 0.01
    %v362 = vmul.f32 %v273, 0.01
    %v363 = vmul.f32 %v277, 0.01
    %v364 = vmul.f32 %v279, 0.01
    %v365 = vmul.f32 %v283, 0.01
    %v366 = vmul.f32 %v285, 0.01
    %v367 = vmul.f32 %v289, 0.01
    %v368 = vmul.f32 %v291, 0.01
    %v369 = vmul.f32 %v295, 0.01
    %v370 = vmul.f32 %v297, 0.01
    %v371 = vmul.f32 %v301, 0.01
    %v372 = vmul.f32 %v303, 0.01
    %v373 = vmul.f32 %v307, 0.01
    %v374 = vmul.f32 %v309, 0.01
    %v375 = vsel %vm311, %v217, %v343
    %v376 = vsel %vm312, %v219, %v344
    %v377 = vsel %vm313, %v223, %v345
    %v378 = vsel %vm314, %v225, %v346
    %v379 = vsel %vm315, %v229, %v347
    %v380 = vsel %vm316, %v231, %v348
    %v381 = vsel %vm317, %v235, %v349
    %v382 = vsel %vm318, %v237, %v350
    %v383 = vsel %vm319, %v241, %v351
    %v384 = vsel %vm320, %v243, %v352
    %v385 = vsel %vm321, %v247, %v353
    %v386 = vsel %vm322, %v249, %v354
    %v387 = vsel %vm323, %v253, %v355
    %v388 = vsel %vm324, %v255, %v356
    %v389 = vsel %vm325, %v259, %v357
    %v390 = vsel %vm326, %v261, %v358
    %v391 = vsel %vm327, %v265, %v359
    %v392 = vsel %vm328, %v267, %v360
    %v393 = vsel %vm329, %v271, %v361
    %v394 = vsel %vm330, %v273, %v362
    %v395 = vsel %vm331, %v277, %v363
    %v396 = vsel %vm332, %v279, %v364
    %v397 = vsel %vm333, %v283, %v365
    %v398 = vsel %vm334, %v285, %v366
    %v399 = vsel %vm335, %v289, %v367
    %v400 = vsel %vm336, %v291, %v368
    %v401 = vsel %vm337, %v295, %v369
    %v402 = vsel %vm338, %v297, %v370
    %v403 = vsel %vm339, %v301, %v371
    %v404 = vsel %vm340, %v303, %v372
    %v405 = vsel %vm341, %v307, %v373
    %v406 = vsel %vm342, %v309, %v374
    %v407 = vld [vmem:[#allocation8] sm:$0xff]
    %v408 = vld [vmem:[#allocation8 + $0x8] sm:$0xff]
    %v409 = vld [vmem:[#allocation8 + $0x10] sm:$0xff]
    %v410 = vld [vmem:[#allocation8 + $0x18] sm:$0xff]
    %v411 = vld [vmem:[#allocation8 + $0x20] sm:$0xff]
    %v412 = vld [vmem:[#allocation8 + $0x28] sm:$0xff]
    %v413 = vld [vmem:[#allocation8 + $0x30] sm:$0xff]
    %v414 = vld [vmem:[#allocation8 + $0x38] sm:$0xff]
    %v415 = vld [vmem:[#allocation8 + $0x40] sm:$0xff]
    %v416 = vld [vmem:[#allocation8 + $0x48] sm:$0xff]
    %v417 = vld [vmem:[#allocation8 + $0x50] sm:$0xff]
    %v418 = vld [vmem:[#allocation8 + $0x58] sm:$0xff]
    %v419 = vld [vmem:[#allocation8 + $0x60] sm:$0xff]
    %v420 = vld [vmem:[#allocation8 + $0x68] sm:$0xff]
    %v421 = vld [vmem:[#allocation8 + $0x70] sm:$0xff]
    %v422 = vld [vmem:[#allocation8 + $0x78] sm:$0xff]
    %v423 = vld [vmem:[#allocation8 + $0x80] sm:$0xff]
    %v424 = vld [vmem:[#allocation8 + $0x88] sm:$0xff]
    %v425 = vld [vmem:[#allocation8 + $0x90] sm:$0xff]
    %v426 = vld [vmem:[#allocation8 + $0x98] sm:$0xff]
    %v427 = vld [vmem:[#allocation8 + $0xa0] sm:$0xff]
    %v428 = vld [vmem:[#allocation8 + $0xa8] sm:$0xff]
    %v429 = vld [vmem:[#allocation8 + $0xb0] sm:$0xff]
    %v430 = vld [vmem:[#allocation8 + $0xb8] sm:$0xff]
    %v431 = vld [vmem:[#allocation8 + $0xc0] sm:$0xff]
    %v432 = vld [vmem:[#allocation8 + $0xc8] sm:$0xff]
    %v433 = vld [vmem:[#allocation8 + $0xd0] sm:$0xff]
    %v434 = vld [vmem:[#allocation8 + $0xd8] sm:$0xff]
    %v435 = vld [vmem:[#allocation8 + $0xe0] sm:$0xff]
    %v436 = vld [vmem:[#allocation8 + $0xe8] sm:$0xff]
    %v437 = vld [vmem:[#allocation8 + $0xf0] sm:$0xff]
    %v438 = vld [vmem:[#allocation8 + $0xf8] sm:$0xff]
    %v439 = vld [vmem:[%s4] sm:$0x1]
    %v441 = vlaneseq
    %v442 = vshrl.u32 %v441, 7
    %v443 = vsub.s32 0, %v442
    %v444 = vrot.slane %v439, %v443
    %446 = vmatprep.subr.mxu0 0.0
    %447 = vmatpush1.msra.mxu0 %v407
    %448 = vmatprep.subr.mxu0 0.0
    %449 = vmatpush1.msra.mxu0 %v408
    %450 = vmatprep.subr.mxu0 0.0
    %451 = vmatpush1.msra.mxu0 %v409
    %452 = vmatprep.subr.mxu0 0.0
    %453 = vmatpush1.msra.mxu0 %v410
    %454 = vmatprep.subr.mxu0 0.0
    %455 = vmatpush1.msra.mxu0 %v411
    %456 = vmatprep.subr.mxu0 0.0
    %457 = vmatpush1.msra.mxu0 %v412
    %458 = vmatprep.subr.mxu0 0.0
    %459 = vmatpush1.msra.mxu0 %v413
    %460 = vmatprep.subr.mxu0 0.0
    %461 = vmatpush1.msra.mxu0 %v414
    %462 = vmatprep.subr.mxu0 0.0
    %463 = vmatpush1.msra.mxu0 %v415
    %464 = vmatprep.subr.mxu0 0.0
    %465 = vmatpush1.msra.mxu0 %v416
    %466 = vmatprep.subr.mxu0 0.0
    %467 = vmatpush1.msra.mxu0 %v417
    %468 = vmatprep.subr.mxu0 0.0
    %469 = vmatpush1.msra.mxu0 %v418
    %470 = vmatprep.subr.mxu0 0.0
    %471 = vmatpush1.msra.mxu0 %v419
    %472 = vmatprep.subr.mxu0 0.0
    %473 = vmatpush1.msra.mxu0 %v420
    %474 = vmatprep.subr.mxu0 0.0
    %475 = vmatpush1.msra.mxu0 %v421
    %476 = vmatprep.subr.mxu0 0.0
    %477 = vmatpush1.msra.mxu0 %v422
    %478 = vmatprep.subr.mxu0 0.0
    %479 = vmatpush1.msra.mxu0 %v423
    %480 = vmatprep.subr.mxu0 0.0
    %481 = vmatpush1.msra.mxu0 %v424
    %482 = vmatprep.subr.mxu0 0.0
    %483 = vmatpush1.msra.mxu0 %v425
    %484 = vmatprep.subr.mxu0 0.0
    %485 = vmatpush1.msra.mxu0 %v426
    %486 = vmatprep.subr.mxu0 0.0
    %487 = vmatpush1.msra.mxu0 %v427
    %488 = vmatprep.subr.mxu0 0.0
    %489 = vmatpush1.msra.mxu0 %v428
    %490 = vmatprep.subr.mxu0 0.0
    %491 = vmatpush1.msra.mxu0 %v429
    %492 = vmatprep.subr.mxu0 0.0
    %493 = vmatpush1.msra.mxu0 %v430
    %494 = vmatprep.subr.mxu0 0.0
    %495 = vmatpush1.msra.mxu0 %v431
    %496 = vmatprep.subr.mxu0 0.0
    %497 = vmatpush1.msra.mxu0 %v432
    %498 = vmatprep.subr.mxu0 0.0
    %499 = vmatpush1.msra.mxu0 %v433
    %500 = vmatprep.subr.mxu0 0.0
    %501 = vmatpush1.msra.mxu0 %v434
    %502 = vmatprep.subr.mxu0 0.0
    %503 = vmatpush1.msra.mxu0 %v435
    %504 = vmatprep.subr.mxu0 0.0
    %505 = vmatpush1.msra.mxu0 %v436
    %506 = vmatprep.subr.mxu0 0.0
    %507 = vmatpush1.msra.mxu0 %v437
    %508 = vmatprep.subr.mxu0 0.0
    %509 = vmatpush1.msra.mxu0 %v438
    %510 = vmatprep.mubr.f32.mxu0 %v376
    %511 = vmatmul.mubr.f32.gmra.mrb[0].mxu0 %v375
    %v512 = vpop.f32.mrb[0].mxu0
    %v513 = vadd.f32 %v444, %v512
    %v514 = vpop.f32.mrb[0].mxu0
    %515 = vmatprep.mubr.f32.mxu0 %v378
    %516 = vmatmul.mubr.f32.gmra.mrb[0].mxu0 %v377
    %v517 = vpop.f32.mrb[0].mxu0
    %v518 = vadd.f32 %v444, %v517
    %v519 = vpop.f32.mrb[0].mxu0
    %520 = vmatprep.mubr.f32.mxu0 %v380
    %521 = vmatmul.mubr.f32.gmra.mrb[0].mxu0 %v379
    %v522 = vpop.f32.mrb[0].mxu0
    %v523 = vadd.f32 %v444, %v522
    %v524 = vpop.f32.mrb[0].mxu0
    %525 = vmatprep.mubr.f32.mxu0 %v382
    %526 = vmatmul.mubr.f32.gmra.mrb[0].mxu0 %v381
    %v527 = vpop.f32.mrb[0].mxu0
    %v528 = vadd.f32 %v444, %v527
    %v529 = vpop.f32.mrb[0].mxu0
    %530 = vmatprep.mubr.f32.mxu0 %v384
    %531 = vmatmul.mubr.f32.gmra.mrb[0].mxu0 %v383
    %v532 = vpop.f32.mrb[0].mxu0
    %v533 = vadd.f32 %v444, %v532
    %v534 = vpop.f32.mrb[0].mxu0
    %535 = vmatprep.mubr.f32.mxu0 %v386
    %536 = vmatmul.mubr.f32.gmra.mrb[0].mxu0 %v385
    %v537 = vpop.f32.mrb[0].mxu0
    %v538 = vadd.f32 %v444, %v537
    %v539 = vpop.f32.mrb[0].mxu0
    %540 = vmatprep.mubr.f32.mxu0 %v388
    %541 = vmatmul.mubr.f32.gmra.mrb[0].mxu0 %v387
    %v542 = vpop.f32.mrb[0].mxu0
    %v543 = vadd.f32 %v444, %v542
    %v544 = vpop.f32.mrb[0].mxu0
    %545 = vmatprep.mubr.f32.mxu0 %v390
    %546 = vmatmul.mubr.f32.gmra.mrb[0].mxu0 %v389
    %v547 = vpop.f32.mrb[0].mxu0
    %v548 = vadd.f32 %v444, %v547
    %v549 = vpop.f32.mrb[0].mxu0
    %550 = vmatprep.mubr.f32.mxu0 %v392
    %551 = vmatmul.mubr.f32.gmra.mrb[0].mxu0 %v391
    %v552 = vpop.f32.mrb[0].mxu0
    %v553 = vadd.f32 %v444, %v552
    %v554 = vpop.f32.mrb[0].mxu0
    %555 = vmatprep.mubr.f32.mxu0 %v394
    %556 = vmatmul.mubr.f32.gmra.mrb[0].mxu0 %v393
    %v557 = vpop.f32.mrb[0].mxu0
    %v558 = vadd.f32 %v444, %v557
    %v559 = vpop.f32.mrb[0].mxu0
    %560 = vmatprep.mubr.f32.mxu0 %v396
    %561 = vmatmul.mubr.f32.gmra.mrb[0].mxu0 %v395
    %v562 = vpop.f32.mrb[0].mxu0
    %v563 = vadd.f32 %v444, %v562
    %v564 = vpop.f32.mrb[0].mxu0
    %565 = vmatprep.mubr.f32.mxu0 %v398
    %566 = vmatmul.mubr.f32.gmra.mrb[0].mxu0 %v397
    %v567 = vpop.f32.mrb[0].mxu0
    %v568 = vadd.f32 %v444, %v567
    %v569 = vpop.f32.mrb[0].mxu0
    %570 = vmatprep.mubr.f32.mxu0 %v400
    %571 = vmatmul.mubr.f32.gmra.mrb[0].mxu0 %v399
    %v572 = vpop.f32.mrb[0].mxu0
    %v573 = vadd.f32 %v444, %v572
    %v574 = vpop.f32.mrb[0].mxu0
    %575 = vmatprep.mubr.f32.mxu0 %v402
    %576 = vmatmul.mubr.f32.gmra.mrb[0].mxu0 %v401
    %v577 = vpop.f32.mrb[0].mxu0
    %v578 = vadd.f32 %v444, %v577
    %v579 = vpop.f32.mrb[0].mxu0
    %580 = vmatprep.mubr.f32.mxu0 %v404
    %581 = vmatmul.mubr.f32.gmra.mrb[0].mxu0 %v403
    %v582 = vpop.f32.mrb[0].mxu0
    %v583 = vadd.f32 %v444, %v582
    %v584 = vpop.f32.mrb[0].mxu0
    %585 = vmatprep.mubr.f32.mxu0 %v406
    %586 = vmatmul.mubr.f32.gmra.mrb[0].mxu0 %v405
    %v587 = vpop.f32.mrb[0].mxu0
    %v588 = vadd.f32 %v444, %v587
    %v589 = vpop.f32.mrb[0].mxu0
    %590 = vdwg.mxu0
    %vm591 = vcmp.gt.f32.partialorder %v513, 0.0
    %vm592 = vcmp.gt.f32.partialorder %v518, 0.0
    %vm593 = vcmp.gt.f32.partialorder %v523, 0.0
    %vm594 = vcmp.gt.f32.partialorder %v528, 0.0
    %vm595 = vcmp.gt.f32.partialorder %v533, 0.0
    %vm596 = vcmp.gt.f32.partialorder %v538, 0.0
    %vm597 = vcmp.gt.f32.partialorder %v543, 0.0
    %vm598 = vcmp.gt.f32.partialorder %v548, 0.0
    %vm599 = vcmp.gt.f32.partialorder %v553, 0.0
    %vm600 = vcmp.gt.f32.partialorder %v558, 0.0
    %vm601 = vcmp.gt.f32.partialorder %v563, 0.0
    %vm602 = vcmp.gt.f32.partialorder %v568, 0.0
    %vm603 = vcmp.gt.f32.partialorder %v573, 0.0
    %vm604 = vcmp.gt.f32.partialorder %v578, 0.0
    %vm605 = vcmp.gt.f32.partialorder %v583, 0.0
    %vm606 = vcmp.gt.f32.partialorder %v588, 0.0
    %v607 = vmul.f32 %v513, 0.01
    %v608 = vmul.f32 %v518, 0.01
    %v609 = vmul.f32 %v523, 0.01
    %v610 = vmul.f32 %v528, 0.01
    %v611 = vmul.f32 %v533, 0.01
    %v612 = vmul.f32 %v538, 0.01
    %v613 = vmul.f32 %v543, 0.01
    %v614 = vmul.f32 %v548, 0.01
    %v615 = vmul.f32 %v553, 0.01
    %v616 = vmul.f32 %v558, 0.01
    %v617 = vmul.f32 %v563, 0.01
    %v618 = vmul.f32 %v568, 0.01
    %v619 = vmul.f32 %v573, 0.01
    %v620 = vmul.f32 %v578, 0.01
    %v621 = vmul.f32 %v583, 0.01
    %v622 = vmul.f32 %v588, 0.01
    %v623 = vsel %vm591, %v513, %v607
    %v624 = vsel %vm592, %v518, %v608
    %v625 = vsel %vm593, %v523, %v609
    %v626 = vsel %vm594, %v528, %v610
    %v627 = vsel %vm595, %v533, %v611
    %v628 = vsel %vm596, %v538, %v612
    %v629 = vsel %vm597, %v543, %v613
    %v630 = vsel %vm598, %v548, %v614
    %v631 = vsel %vm599, %v553, %v615
    %v632 = vsel %vm600, %v558, %v616
    %v633 = vsel %vm601, %v563, %v617
    %v634 = vsel %vm602, %v568, %v618
    %v635 = vsel %vm603, %v573, %v619
    %v636 = vsel %vm604, %v578, %v620
    %v637 = vsel %vm605, %v583, %v621
    %v638 = vsel %vm606, %v588, %v622
    %v639 = vld [vmem:[#allocation9] sm:$0xff]
    %v640 = vld [vmem:[#allocation9 + $0x8] sm:$0xff]
    %v641 = vld [vmem:[#allocation9 + $0x10] sm:$0xff]
    %v642 = vld [vmem:[#allocation9 + $0x18] sm:$0xff]
    %v643 = vld [vmem:[#allocation9 + $0x20] sm:$0xff]
    %v644 = vld [vmem:[#allocation9 + $0x28] sm:$0xff]
    %v645 = vld [vmem:[#allocation9 + $0x30] sm:$0xff]
    %v646 = vld [vmem:[#allocation9 + $0x38] sm:$0xff]
    %v647 = vld [vmem:[#allocation9 + $0x40] sm:$0xff]
    %v648 = vld [vmem:[#allocation9 + $0x48] sm:$0xff]
    %v649 = vld [vmem:[#allocation9 + $0x50] sm:$0xff]
    %v650 = vld [vmem:[#allocation9 + $0x58] sm:$0xff]
    %v651 = vld [vmem:[#allocation9 + $0x60] sm:$0xff]
    %v652 = vld [vmem:[#allocation9 + $0x68] sm:$0xff]
    %v653 = vld [vmem:[#allocation9 + $0x70] sm:$0xff]
    %v654 = vld [vmem:[#allocation9 + $0x78] sm:$0xff]
    %v655 = vld [vmem:[%s6] sm:$0x1]
    %v657 = vlaneseq
    %v658 = vshrl.u32 %v657, 7
    %v659 = vsub.s32 0, %v658
    %v660 = vrot.slane %v655, %v659
    %662 = vmatprep.subr.mxu0 0.0
    %663 = vmatpush1.msra.mxu0 %v639
    %664 = vmatprep.subr.mxu0 0.0
    %665 = vmatpush1.msra.mxu0 %v640
    %666 = vmatprep.subr.mxu0 0.0
    %667 = vmatpush1.msra.mxu0 %v641
    %668 = vmatprep.subr.mxu0 0.0
    %669 = vmatpush1.msra.mxu0 %v642
    %670 = vmatprep.subr.mxu0 0.0
    %671 = vmatpush1.msra.mxu0 %v643
    %672 = vmatprep.subr.mxu0 0.0
    %673 = vmatpush1.msra.mxu0 %v644
    %674 = vmatprep.subr.mxu0 0.0
    %675 = vmatpush1.msra.mxu0 %v645
    %676 = vmatprep.subr.mxu0 0.0
    %677 = vmatpush1.msra.mxu0 %v646
    %678 = vmatprep.subr.mxu0 0.0
    %679 = vmatpush1.msra.mxu0 %v647
    %680 = vmatprep.subr.mxu0 0.0
    %681 = vmatpush1.msra.mxu0 %v648
    %682 = vmatprep.subr.mxu0 0.0
    %683 = vmatpush1.msra.mxu0 %v649
    %684 = vmatprep.subr.mxu0 0.0
    %685 = vmatpush1.msra.mxu0 %v650
    %686 = vmatprep.subr.mxu0 0.0
    %687 = vmatpush1.msra.mxu0 %v651
    %688 = vmatprep.subr.mxu0 0.0
    %689 = vmatpush1.msra.mxu0 %v652
    %690 = vmatprep.subr.mxu0 0.0
    %691 = vmatpush1.msra.mxu0 %v653
    %692 = vmatprep.subr.mxu0 0.0
    %693 = vmatpush1.msra.mxu0 %v654
    %694 = vmatprep.subr.mxu0 0.0
    %695 = vmatpush1.msra.mxu0 0.0
    %696 = vmatprep.subr.mxu0 0.0
    %697 = vmatpush1.msra.mxu0 0.0
    %698 = vmatprep.subr.mxu0 0.0
    %699 = vmatpush1.msra.mxu0 0.0
    %700 = vmatprep.subr.mxu0 0.0
    %701 = vmatpush1.msra.mxu0 0.0
    %702 = vmatprep.subr.mxu0 0.0
    %703 = vmatpush1.msra.mxu0 0.0
    %704 = vmatprep.subr.mxu0 0.0
    %705 = vmatpush1.msra.mxu0 0.0
    %706 = vmatprep.subr.mxu0 0.0
    %707 = vmatpush1.msra.mxu0 0.0
    %708 = vmatprep.subr.mxu0 0.0
    %709 = vmatpush1.msra.mxu0 0.0
    %710 = vmatprep.subr.mxu0 0.0
    %711 = vmatpush1.msra.mxu0 0.0
    %712 = vmatprep.subr.mxu0 0.0
    %713 = vmatpush1.msra.mxu0 0.0
    %714 = vmatprep.subr.mxu0 0.0
    %715 = vmatpush1.msra.mxu0 0.0
    %716 = vmatprep.subr.mxu0 0.0
    %717 = vmatpush1.msra.mxu0 0.0
    %718 = vmatprep.subr.mxu0 0.0
    %719 = vmatpush1.msra.mxu0 0.0
    %720 = vmatprep.subr.mxu0 0.0
    %721 = vmatpush1.msra.mxu0 0.0
    %722 = vmatprep.subr.mxu0 0.0
    %723 = vmatpush1.msra.mxu0 0.0
    %724 = vmatprep.subr.mxu0 0.0
    %725 = vmatpush1.msra.mxu0 0.0
    %726 = vmatprep.mubr.f32.mxu0 0.0
    %727 = vmatmul.mubr.f32.gmra.mrb[0].mxu0 %v623
    %v728 = vpop.f32.mrb[0].mxu0
    %v729 = vadd.f32 %v660, %v728
    %v730 = vpop.f32.mrb[0].mxu0
    %731 = vmatprep.mubr.f32.mxu0 0.0
    %732 = vmatmul.mubr.f32.gmra.mrb[0].mxu0 %v624
    %v733 = vpop.f32.mrb[0].mxu0
    %v734 = vadd.f32 %v660, %v733
    %v735 = vpop.f32.mrb[0].mxu0
    %736 = vmatprep.mubr.f32.mxu0 0.0
    %737 = vmatmul.mubr.f32.gmra.mrb[0].mxu0 %v625
    %v738 = vpop.f32.mrb[0].mxu0
    %v739 = vadd.f32 %v660, %v738
    %v740 = vpop.f32.mrb[0].mxu0
    %741 = vmatprep.mubr.f32.mxu0 0.0
    %742 = vmatmul.mubr.f32.gmra.mrb[0].mxu0 %v626
    %v743 = vpop.f32.mrb[0].mxu0
    %v744 = vadd.f32 %v660, %v743
    %v745 = vpop.f32.mrb[0].mxu0
    %746 = vmatprep.mubr.f32.mxu0 0.0
    %747 = vmatmul.mubr.f32.gmra.mrb[0].mxu0 %v627
    %v748 = vpop.f32.mrb[0].mxu0
    %v749 = vadd.f32 %v660, %v748
    %v750 = vpop.f32.mrb[0].mxu0
    %751 = vmatprep.mubr.f32.mxu0 0.0
    %752 = vmatmul.mubr.f32.gmra.mrb[0].mxu0 %v628
    %v753 = vpop.f32.mrb[0].mxu0
    %v754 = vadd.f32 %v660, %v753
    %v755 = vpop.f32.mrb[0].mxu0
    %756 = vmatprep.mubr.f32.mxu0 0.0
    %757 = vmatmul.mubr.f32.gmra.mrb[0].mxu0 %v629
    %v758 = vpop.f32.mrb[0].mxu0
    %v759 = vadd.f32 %v660, %v758
    %v760 = vpop.f32.mrb[0].mxu0
    %761 = vmatprep.mubr.f32.mxu0 0.0
    %762 = vmatmul.mubr.f32.gmra.mrb[0].mxu0 %v630
    %v763 = vpop.f32.mrb[0].mxu0
    %v764 = vadd.f32 %v660, %v763
    %v765 = vpop.f32.mrb[0].mxu0
    %766 = vmatprep.mubr.f32.mxu0 0.0
    %767 = vmatmul.mubr.f32.gmra.mrb[0].mxu0 %v631
    %v768 = vpop.f32.mrb[0].mxu0
    %v769 = vadd.f32 %v660, %v768
    %v770 = vpop.f32.mrb[0].mxu0
    %771 = vmatprep.mubr.f32.mxu0 0.0
    %772 = vmatmul.mubr.f32.gmra.mrb[0].mxu0 %v632
    %v773 = vpop.f32.mrb[0].mxu0
    %v774 = vadd.f32 %v660, %v773
    %v775 = vpop.f32.mrb[0].mxu0
    %776 = vmatprep.mubr.f32.mxu0 0.0
    %777 = vmatmul.mubr.f32.gmra.mrb[0].mxu0 %v633
    %v778 = vpop.f32.mrb[0].mxu0
    %v779 = vadd.f32 %v660, %v778
    %v780 = vpop.f32.mrb[0].mxu0
    %781 = vmatprep.mubr.f32.mxu0 0.0
    %782 = vmatmul.mubr.f32.gmra.mrb[0].mxu0 %v634
    %v783 = vpop.f32.mrb[0].mxu0
    %v784 = vadd.f32 %v660, %v783
    %v785 = vpop.f32.mrb[0].mxu0
    %786 = vmatprep.mubr.f32.mxu0 0.0
    %787 = vmatmul.mubr.f32.gmra.mrb[0].mxu0 %v635
    %v788 = vpop.f32.mrb[0].mxu0
    %v789 = vadd.f32 %v660, %v788
    %v790 = vpop.f32.mrb[0].mxu0
    %791 = vmatprep.mubr.f32.mxu0 0.0
    %792 = vmatmul.mubr.f32.gmra.mrb[0].mxu0 %v636
    %v793 = vpop.f32.mrb[0].mxu0
    %v794 = vadd.f32 %v660, %v793
    %v795 = vpop.f32.mrb[0].mxu0
    %796 = vmatprep.mubr.f32.mxu0 0.0
    %797 = vmatmul.mubr.f32.gmra.mrb[0].mxu0 %v637
    %v798 = vpop.f32.mrb[0].mxu0
    %v799 = vadd.f32 %v660, %v798
    %v800 = vpop.f32.mrb[0].mxu0
    %801 = vmatprep.mubr.f32.mxu0 0.0
    %802 = vmatmul.mubr.f32.gmra.mrb[0].mxu0 %v638
    %v803 = vpop.f32.mrb[0].mxu0
    %v804 = vadd.f32 %v660, %v803
    %v805 = vpop.f32.mrb[0].mxu0
    %806 = vdwg.mxu0
    %vm807 = vcmp.gt.f32.partialorder %v729, 0.0
    %vm808 = vcmp.gt.f32.partialorder %v734, 0.0
    %vm809 = vcmp.gt.f32.partialorder %v739, 0.0
    %vm810 = vcmp.gt.f32.partialorder %v744, 0.0
    %vm811 = vcmp.gt.f32.partialorder %v749, 0.0
    %vm812 = vcmp.gt.f32.partialorder %v754, 0.0
    %vm813 = vcmp.gt.f32.partialorder %v759, 0.0
    %vm814 = vcmp.gt.f32.partialorder %v764, 0.0
    %vm815 = vcmp.gt.f32.partialorder %v769, 0.0
    %vm816 = vcmp.gt.f32.partialorder %v774, 0.0
    %vm817 = vcmp.gt.f32.partialorder %v779, 0.0
    %vm818 = vcmp.gt.f32.partialorder %v784, 0.0
    %vm819 = vcmp.gt.f32.partialorder %v789, 0.0
    %vm820 = vcmp.gt.f32.partialorder %v794, 0.0
    %vm821 = vcmp.gt.f32.partialorder %v799, 0.0
    %vm822 = vcmp.gt.f32.partialorder %v804, 0.0
    %v823 = vmul.f32 %v729, 0.01
    %v824 = vmul.f32 %v734, 0.01
    %v825 = vmul.f32 %v739, 0.01
    %v826 = vmul.f32 %v744, 0.01
    %v827 = vmul.f32 %v749, 0.01
    %v828 = vmul.f32 %v754, 0.01
    %v829 = vmul.f32 %v759, 0.01
    %v830 = vmul.f32 %v764, 0.01
    %v831 = vmul.f32 %v769, 0.01
    %v832 = vmul.f32 %v774, 0.01
    %v833 = vmul.f32 %v779, 0.01
    %v834 = vmul.f32 %v784, 0.01
    %v835 = vmul.f32 %v789, 0.01
    %v836 = vmul.f32 %v794, 0.01
    %v837 = vmul.f32 %v799, 0.01
    %v838 = vmul.f32 %v804, 0.01
    %v839 = vsel %vm807, %v729, %v823
    %v840 = vsel %vm808, %v734, %v824
    %v841 = vsel %vm809, %v739, %v825
    %v842 = vsel %vm810, %v744, %v826
    %v843 = vsel %vm811, %v749, %v827
    %v844 = vsel %vm812, %v754, %v828
    %v845 = vsel %vm813, %v759, %v829
    %v846 = vsel %vm814, %v764, %v830
    %v847 = vsel %vm815, %v769, %v831
    %v848 = vsel %vm816, %v774, %v832
    %v849 = vsel %vm817, %v779, %v833
    %v850 = vsel %vm818, %v784, %v834
    %v851 = vsel %vm819, %v789, %v835
    %v852 = vsel %vm820, %v794, %v836
    %v853 = vsel %vm821, %v799, %v837
    %v854 = vsel %vm822, %v804, %v838
    %v855 = vld [vmem:[%s7] sm:$0x1]
    %v856 = vld [vmem:[#allocation2] sm:$0x1]
    %858 = vset.pattern.permute.xlu0 0
    %859 = vperm.xlu0 %858, %v856
    %v860 = vpop.permute.xlu0 %859
    %v862 = vlaneseq
    %v863 = vshrl.u32 %v862, 7
    %v864 = vsub.s32 0, %v863
    %v865 = vrot.slane %v860, %v864
    %866 = vmatprep.subr.mxu0 0.0
    %867 = vmatpush1.xpose.msra.mxu0 %v839
    %868 = vmatprep.subr.mxu0 0.0
    %869 = vmatpush1.xpose.msra.mxu0 %v840
    %870 = vmatprep.subr.mxu0 0.0
    %871 = vmatpush1.xpose.msra.mxu0 %v841
    %872 = vmatprep.subr.mxu0 0.0
    %873 = vmatpush1.xpose.msra.mxu0 %v842
    %874 = vmatprep.subr.mxu0 0.0
    %875 = vmatpush1.xpose.msra.mxu0 %v843
    %876 = vmatprep.subr.mxu0 0.0
    %877 = vmatpush1.xpose.msra.mxu0 %v844
    %878 = vmatprep.subr.mxu0 0.0
    %879 = vmatpush1.xpose.msra.mxu0 %v845
    %880 = vmatprep.subr.mxu0 0.0
    %881 = vmatpush1.xpose.msra.mxu0 %v846
    %882 = vmatprep.subr.mxu0 0.0
    %883 = vmatpush1.xpose.msra.mxu0 %v847
    %884 = vmatprep.subr.mxu0 0.0
    %885 = vmatpush1.xpose.msra.mxu0 %v848
    %886 = vmatprep.subr.mxu0 0.0
    %887 = vmatpush1.xpose.msra.mxu0 %v849
    %888 = vmatprep.subr.mxu0 0.0
    %889 = vmatpush1.xpose.msra.mxu0 %v850
    %890 = vmatprep.subr.mxu0 0.0
    %891 = vmatpush1.xpose.msra.mxu0 %v851
    %892 = vmatprep.subr.mxu0 0.0
    %893 = vmatpush1.xpose.msra.mxu0 %v852
    %894 = vmatprep.subr.mxu0 0.0
    %895 = vmatpush1.xpose.msra.mxu0 %v853
    %896 = vmatprep.subr.mxu0 0.0
    %897 = vmatpush1.xpose.msra.mxu0 %v854
    %898 = vmatprep.subr.mxu0 0.0
    %899 = vmatpush1.xpose.msra.mxu0 0.0
    %900 = vmatprep.subr.mxu0 0.0
    %901 = vmatpush1.xpose.msra.mxu0 0.0
    %902 = vmatprep.subr.mxu0 0.0
    %903 = vmatpush1.xpose.msra.mxu0 0.0
    %904 = vmatprep.subr.mxu0 0.0
    %905 = vmatpush1.xpose.msra.mxu0 0.0
    %906 = vmatprep.subr.mxu0 0.0
    %907 = vmatpush1.xpose.msra.mxu0 0.0
    %908 = vmatprep.subr.mxu0 0.0
    %909 = vmatpush1.xpose.msra.mxu0 0.0
    %910 = vmatprep.subr.mxu0 0.0
    %911 = vmatpush1.xpose.msra.mxu0 0.0
    %912 = vmatprep.subr.mxu0 0.0
    %913 = vmatpush1.xpose.msra.mxu0 0.0
    %914 = vmatprep.subr.mxu0 0.0
    %915 = vmatpush1.xpose.msra.mxu0 0.0
    %916 = vmatprep.subr.mxu0 0.0
    %917 = vmatpush1.xpose.msra.mxu0 0.0
    %918 = vmatprep.subr.mxu0 0.0
    %919 = vmatpush1.xpose.msra.mxu0 0.0
    %920 = vmatprep.subr.mxu0 0.0
    %921 = vmatpush1.xpose.msra.mxu0 0.0
    %922 = vmatprep.subr.mxu0 0.0
    %923 = vmatpush1.xpose.msra.mxu0 0.0
    %924 = vmatprep.subr.mxu0 0.0
    %925 = vmatpush1.xpose.msra.mxu0 0.0
    %926 = vmatprep.subr.mxu0 0.0
    %927 = vmatpush1.xpose.msra.mxu0 0.0
    %928 = vmatprep.subr.mxu0 0.0
    %929 = vmatpush1.xpose.msra.mxu0 0.0
    %930 = vmatprep.mubr.f32.mxu0 0.0
    %931 = vmatmul.mubr.f32.gmra.mrb[0].mxu0 %v855
    %v932 = vpop.f32.mrb[0].mxu0
    %v933 = vadd.f32 %v865, %v932
    %v934 = vpop.f32.mrb[0].mxu0
    %935 = vdwg.mxu0
    %936 = vst [vmem:[#allocation11] sm:$0x1] %v933
    // Predicated region
    $region54: #{tpu_custom_call.1} parent=1 // pred_check
      _
    $region55: #{tpu_custom_call.1} parent=1 // pred_check_branch
      %938 = sbr.rel (0) target = $region57
    $region56: #{tpu_custom_call.1} parent=1 // pred_region
      %s940 = ssub.s32 16, 16
      %941 = vsyncadd [#allocation5], %s940
      %s943 = sshll.u32 [#allocation11], 4
      %s944 = int_to_ptr.vmem [resolvable:$true] %s943
      %946 = dma.vmem_to_hbm [thread:$0]  %s944, 16, %s9, [#allocation5]
    $region57: #{tpu_custom_call.1} parent=1 // pred_fallthru
      _
    // Predicated region
    $region58: #{tpu_custom_call.1} parent=1 // pred_check
      _
    $region59: #{tpu_custom_call.1} parent=1 // pred_check_branch
      %948 = sbr.rel (0) target = $region61
    $region60: #{tpu_custom_call.1} parent=1 // pred_region
      %949 = dma.done [#allocation5], 16
    $region61: #{tpu_custom_call.1} parent=1 // pred_fallthru
      _
    %950 = vsyncpa [#allocation4], 1
    %951 = vsyncpa [#allocation7], 1
    %952 = vsyncpa [#allocation10], 1
    %953 = vsyncpa [#allocation5], 1

</llo_original>
